<compile_context>
chip_gen: v6e
topology: v6e:2x2x1
jax: 0.10.0
libtpu: 0.0.40
codegen_flags: <defaults>
</compile_context>

<pallas_src>
import functools

import jax
import jax.numpy as jnp
from jax import lax
from jax.experimental import pallas as pl
from jax.experimental.pallas import tpu as pltpu

LEAKY_SLOPE = 0.01  # nn.LeakyReLU default
IN_EPS = 1e-5       # nn.InstanceNorm2d default eps


def _conv_adain_kernel(x_ref, wt_ref, bc_ref, zm_ref, zv_ref, g_ref, be_ref,
                       o_ref, *, hw_inv):
    # ---- Conv2d('same') as a single deep MXU matmul on the im2col LHS -------
    a = jnp.dot(x_ref[...], wt_ref[...],
                preferred_element_type=jnp.float32) + bc_ref[...]   # (HW, TC)
    a = jnp.maximum(a, LEAKY_SLOPE * a)                             # LeakyReLU

    # ---- InstanceNorm2d stats (per channel, two-pass variance) --------------
    mean = jnp.sum(a, axis=0, keepdims=True) * hw_inv               # (1, TC)
    c = a - mean
    var = jnp.sum(c * c, axis=0, keepdims=True) * hw_inv
    inv = lax.rsqrt(var + IN_EPS)

    # ---- Fold IN-affine + AdaIn into one per-channel scale + shift ----------
    scale = g_ref[...] * inv * zv_ref[...]                          # (1, TC)
    shift = be_ref[...] * zv_ref[...] + zm_ref[...]
    o_ref[...] = (c * scale + shift).astype(o_ref.dtype)


def conv2d_adain_forward(x_nchw, z, params, kernel_size=3, use_bf16_matmul=False):
    N, Cin, H, W = x_nchw.shape
    Cout = params["conv_b"].shape[0]
    K = kernel_size
    pad = K // 2
    HW = H * W
    KKC = K * K * Cin
    TC = 256 if Cout >= 256 else 128                 # lane-dense channel tile
    Cp = ((Cout + TC - 1) // TC) * TC
    n_ct = Cp // TC
    KKCp = ((KKC + 127) // 128) * 128                # lane-dense contraction depth

    mm_dtype = jnp.bfloat16 if use_bf16_matmul else jnp.float32

    # ---- cheap wrapper-side im2col: (N, H*W, K*K*Cin), zero-padded 'same' ----
    xh = jnp.transpose(x_nchw, (0, 2, 3, 1))                        # NHWC
    xp = jnp.pad(xh, ((0, 0), (pad, pad), (pad, pad), (0, 0)))
    patches = [xp[:, dh:dh + H, dw:dw + W, :]
               for dh in range(K) for dw in range(K)]
    xflat = jnp.concatenate(patches, axis=-1).reshape(N, HW, KKC)
    xflat = jnp.pad(xflat, ((0, 0), (0, 0), (0, KKCp - KKC))).astype(mm_dtype)

    # ---- conv weight (Cout, Cin, K, K) -> (K*K*Cin, Cp), tap-major/Cin-minor -
    wt = jnp.transpose(params["conv_w"], (2, 3, 1, 0)).reshape(KKC, Cout)
    wt = jnp.pad(wt, ((0, KKCp - KKC), (0, Cp - Cout))).astype(mm_dtype)
    bc = jnp.pad(params["conv_b"], (0, Cp - Cout)).reshape(1, Cp).astype(jnp.float32)

    # ---- AdaIn MLP hoisted out of the kernel (tiny: N*Zs*2*Cout flops) -------
    zz = jnp.dot(z, params["mlp_w"].T,
                 precision=lax.Precision.HIGHEST) + params["mlp_b"]  # (N, 2*Cout)
    z_mean = jnp.pad(zz[:, :Cout], ((0, 0), (0, Cp - Cout)))
    z_var = jnp.pad(jax.nn.softplus(zz[:, Cout:]), ((0, 0), (0, Cp - Cout)))
    z_mean = z_mean.reshape(N, 1, Cp).astype(jnp.float32)
    z_var = z_var.reshape(N, 1, Cp).astype(jnp.float32)

    g = jnp.pad(params["in_gamma"], (0, Cp - Cout),
                constant_values=1.0).reshape(1, Cp).astype(jnp.float32)
    be = jnp.pad(params["in_beta"], (0, Cp - Cout)).reshape(1, Cp).astype(jnp.float32)

    kernel = functools.partial(_conv_adain_kernel, hw_inv=1.0 / float(HW))

    # ---- VMEM / cost bookkeeping (per-generation VMEM cap) -------------------
    in_item = 2 if use_bf16_matmul else 4
    vmem_est = (2 * HW * KKCp * in_item        # im2col block (double-buffered)
                + 2 * HW * TC * 4              # output block (double-buffered)
                + 2 * KKCp * TC * in_item      # weight tile
                + 16 * TC * 4)                 # small per-channel rows
    try:
        phys_vmem = int(getattr(pltpu.get_tpu_info(), "vmem_capacity_bytes",
                                128 * 1024 * 1024))
    except Exception:                          # interpret mode / older runtimes
        phys_vmem = 128 * 1024 * 1024
    cap = 56 * 1024 * 1024 if phys_vmem <= 64 * 1024 * 1024 else 100 * 1024 * 1024
    vmem_limit = int(min(max(2 * vmem_est, 32 * 1024 * 1024), cap))

    cost = pl.CostEstimate(
        flops=int(2 * N * HW * KKCp * Cp + 8 * N * HW * Cp),
        transcendentals=int(N * Cp),
        bytes_accessed=int(N * HW * KKCp * in_item + N * HW * Cp * 4
                           + KKCp * Cp * in_item + 4 * N * Cp * 4 + 3 * Cp * 4),
    )

    out = pl.pallas_call(
        kernel,
        out_shape=jax.ShapeDtypeStruct((N, HW, Cp), jnp.float32),
        grid_spec=pltpu.PrefetchScalarGridSpec(
            num_scalar_prefetch=0,
            grid=(N, n_ct),
            in_specs=[
                pl.BlockSpec((None, HW, KKCp), lambda b, c: (b, 0, 0)),  # im2col x
                pl.BlockSpec((KKCp, TC), lambda b, c: (0, c)),           # conv W
                pl.BlockSpec((1, TC), lambda b, c: (0, c)),              # conv bias
                pl.BlockSpec((None, 1, TC), lambda b, c: (b, 0, c)),     # AdaIn mean
                pl.BlockSpec((None, 1, TC), lambda b, c: (b, 0, c)),     # AdaIn var
                pl.BlockSpec((1, TC), lambda b, c: (0, c)),              # IN gamma
                pl.BlockSpec((1, TC), lambda b, c: (0, c)),              # IN beta
            ],
            out_specs=pl.BlockSpec((None, HW, TC), lambda b, c: (b, 0, c)),
        ),
        compiler_params=pltpu.CompilerParams(
            dimension_semantics=("parallel", "parallel"),
            vmem_limit_bytes=vmem_limit),
        cost_estimate=cost,
    )(xflat, wt, bc, z_mean, z_var, g, be)

    # strip padded channels, back to NCHW (module interface)
    out = out.reshape(N, H, W, Cp)[:, :, :, :Cout]
    return jnp.transpose(out, (0, 3, 1, 2)).astype(x_nchw.dtype)


def reference_forward(x_nchw, z, params):
    """Pure-JAX reference mirroring the PyTorch module."""
    Cout = params["conv_b"].shape[0]
    out = lax.conv_general_dilated(
        x_nchw, params["conv_w"], window_strides=(1, 1), padding="SAME",
        dimension_numbers=("NCHW", "OIHW", "NCHW"),
        precision=lax.Precision.HIGHEST)
    out = out + params["conv_b"][None, :, None, None]
    out = jnp.where(out >= 0, out, LEAKY_SLOPE * out)
    mean = jnp.mean(out, axis=(2, 3), keepdims=True)
    var = jnp.mean((out - mean) ** 2, axis=(2, 3), keepdims=True)
    xn = (out - mean) / jnp.sqrt(var + IN_EPS)
    xn = xn * params["in_gamma"][None, :, None, None] + params["in_beta"][None, :, None, None]
    zz = jnp.dot(z, params["mlp_w"].T, precision=lax.Precision.HIGHEST) + params["mlp_b"]
    z_mean = zz[:, :Cout][:, :, None, None]
    z_var = jax.nn.softplus(zz[:, Cout:])[:, :, None, None]
    return xn * z_var + z_mean


def init_params(key, in_ch, num_feature_maps, z_size, kernel_size=3):
    k1, k2, k3, k4 = jax.random.split(key, 4)
    return {
        "conv_w": 0.1 * jax.random.normal(
            k1, (num_feature_maps, in_ch, kernel_size, kernel_size), jnp.float32),
        "conv_b": 0.1 * jax.random.normal(k2, (num_feature_maps,), jnp.float32),
        "mlp_w": 0.1 * jax.random.normal(
            k3, (2 * num_feature_maps, z_size), jnp.float32),
        "mlp_b": 0.1 * jax.random.normal(k4, (2 * num_feature_maps,), jnp.float32),
        # nn.InstanceNorm2d(affine=True) init: weight=1, bias=0
        "in_gamma": jnp.ones((num_feature_maps,), jnp.float32),
        "in_beta": jnp.zeros((num_feature_maps,), jnp.float32),
    }


if __name__ == "__main__":
    N, Cin, H, W = 2, 4, 16, 16
    Cout, Zs = 8, 32

    key = jax.random.PRNGKey(0)
    kx, kz, kp = jax.random.split(key, 3)
    x = jax.random.normal(kx, (N, Cin, H, W), jnp.float32)
    z = jax.random.normal(kz, (N, Zs), jnp.float32)
    params = init_params(kp, Cin, Cout, Zs)

    out = jax.block_until_ready(conv2d_adain_forward(x, z, params))
    ref = jax.block_until_ready(reference_forward(x, z, params))

    assert out.shape == (N, Cout, H, W), out.shape
    max_err = float(jnp.max(jnp.abs(out - ref)))
    assert jnp.allclose(out, ref, rtol=1e-3, atol=1e-3), max_err

    print("KERNEL_OK")
</pallas_src>

<mosaic_0001>
module attributes {stable_mosaic.version = 11 : i64} {
  func.func @_conv_adain_kernel(%arg0: i32, %arg1: i32, %arg2: memref<1x256x128xf32, #tpu.memory_space<vmem>>, %arg3: memref<128x128xf32, #tpu.memory_space<vmem>>, %arg4: memref<1x128xf32, #tpu.memory_space<vmem>>, %arg5: memref<1x1x128xf32, #tpu.memory_space<vmem>>, %arg6: memref<1x1x128xf32, #tpu.memory_space<vmem>>, %arg7: memref<1x128xf32, #tpu.memory_space<vmem>>, %arg8: memref<1x128xf32, #tpu.memory_space<vmem>>, %arg9: memref<1x256x128xf32, #tpu.memory_space<vmem>>) attributes {dimension_semantics = [#tpu.dimension_semantics<parallel>, #tpu.dimension_semantics<parallel>], iteration_bounds = array<i64: 2, 1>, scalar_prefetch = 0 : i64, scratch_operands = 0 : i64, tpu.core_type = #tpu.core_type<tc>, window_params = [{transform_indices = @transform_0, window_bounds = array<i64: 1, 256, 128>}, {transform_indices = @transform_1, window_bounds = array<i64: 128, 128>}, {transform_indices = @transform_2, window_bounds = array<i64: 1, 128>}, {transform_indices = @transform_3, window_bounds = array<i64: 1, 1, 128>}, {transform_indices = @transform_4, window_bounds = array<i64: 1, 1, 128>}, {transform_indices = @transform_5, window_bounds = array<i64: 1, 128>}, {transform_indices = @transform_6, window_bounds = array<i64: 1, 128>}, {transform_indices = @transform_7, window_bounds = array<i64: 1, 256, 128>}]} {
    %c0 = arith.constant 0 : index
    %c0_0 = arith.constant 0 : index
    %c0_1 = arith.constant 0 : index
    %0 = vector.load %arg2[%c0, %c0_0, %c0_1] : memref<1x256x128xf32, #tpu.memory_space<vmem>>, vector<1x256x128xf32>
    %1 = vector.shape_cast %0 : vector<1x256x128xf32> to vector<256x128xf32>
    %c0_2 = arith.constant 0 : index
    %c0_3 = arith.constant 0 : index
    %2 = vector.load %arg3[%c0_2, %c0_3] : memref<128x128xf32, #tpu.memory_space<vmem>>, vector<128x128xf32>
    %cst = arith.constant dense<0.000000e+00> : vector<256x128xf32>
    %3 = tpu.matmul %1, %2, %cst {dimension_numbers = #tpu.dot_dimension_numbers<[1], [0], [0], [1], [0, 0, 1, 1], [], []>} : vector<256x128xf32>, vector<128x128xf32>, vector<256x128xf32> -> vector<256x128xf32>
    %c0_4 = arith.constant 0 : index
    %c0_5 = arith.constant 0 : index
    %4 = vector.load %arg4[%c0_4, %c0_5] : memref<1x128xf32, #tpu.memory_space<vmem>>, vector<1x128xf32>
    %5 = vector.broadcast %4 : vector<1x128xf32> to vector<256x128xf32>
    %6 = arith.addf %3, %5 : vector<256x128xf32>
    %cst_6 = arith.constant 0.00999999977 : f32
    %7 = vector.broadcast %cst_6 : f32 to vector<256x128xf32>
    %8 = arith.mulf %7, %6 : vector<256x128xf32>
    %9 = arith.maximumf %6, %8 : vector<256x128xf32>
    %cst_7 = arith.constant dense<0.000000e+00> : vector<128xf32>
    %10 = vector.multi_reduction <add>, %9, %cst_7 [0] : vector<256x128xf32> to vector<128xf32>
    %11 = vector.shape_cast %10 : vector<128xf32> to vector<1x128xf32>
    %cst_8 = arith.constant 3.906250e-03 : f32
    %12 = vector.broadcast %cst_8 : f32 to vector<1x128xf32>
    %13 = arith.mulf %11, %12 : vector<1x128xf32>
    %14 = vector.broadcast %13 : vector<1x128xf32> to vector<256x128xf32>
    %15 = arith.subf %9, %14 : vector<256x128xf32>
    %16 = arith.mulf %15, %15 : vector<256x128xf32>
    %cst_9 = arith.constant dense<0.000000e+00> : vector<128xf32>
    %17 = vector.multi_reduction <add>, %16, %cst_9 [0] : vector<256x128xf32> to vector<128xf32>
    %18 = vector.shape_cast %17 : vector<128xf32> to vector<1x128xf32>
    %cst_10 = arith.constant 3.906250e-03 : f32
    %19 = vector.broadcast %cst_10 : f32 to vector<1x128xf32>
    %20 = arith.mulf %18, %19 : vector<1x128xf32>
    %cst_11 = arith.constant 9.99999974E-6 : f32
    %21 = vector.broadcast %cst_11 : f32 to vector<1x128xf32>
    %22 = arith.addf %20, %21 : vector<1x128xf32>
    %23 = math.rsqrt %22 : vector<1x128xf32>
    %c0_12 = arith.constant 0 : index
    %c0_13 = arith.constant 0 : index
    %24 = vector.load %arg7[%c0_12, %c0_13] : memref<1x128xf32, #tpu.memory_space<vmem>>, vector<1x128xf32>
    %25 = arith.mulf %24, %23 : vector<1x128xf32>
    %c0_14 = arith.constant 0 : index
    %c0_15 = arith.constant 0 : index
    %c0_16 = arith.constant 0 : index
    %26 = vector.load %arg6[%c0_14, %c0_15, %c0_16] : memref<1x1x128xf32, #tpu.memory_space<vmem>>, vector<1x1x128xf32>
    %27 = vector.shape_cast %26 : vector<1x1x128xf32> to vector<1x128xf32>
    %28 = arith.mulf %25, %27 : vector<1x128xf32>
    %c0_17 = arith.constant 0 : index
    %c0_18 = arith.constant 0 : index
    %29 = vector.load %arg8[%c0_17, %c0_18] : memref<1x128xf32, #tpu.memory_space<vmem>>, vector<1x128xf32>
    %c0_19 = arith.constant 0 : index
    %c0_20 = arith.constant 0 : index
    %c0_21 = arith.constant 0 : index
    %30 = vector.load %arg6[%c0_19, %c0_20, %c0_21] : memref<1x1x128xf32, #tpu.memory_space<vmem>>, vector<1x1x128xf32>
    %31 = vector.shape_cast %30 : vector<1x1x128xf32> to vector<1x128xf32>
    %32 = arith.mulf %29, %31 : vector<1x128xf32>
    %c0_22 = arith.constant 0 : index
    %c0_23 = arith.constant 0 : index
    %c0_24 = arith.constant 0 : index
    %33 = vector.load %arg5[%c0_22, %c0_23, %c0_24] : memref<1x1x128xf32, #tpu.memory_space<vmem>>, vector<1x1x128xf32>
    %34 = vector.shape_cast %33 : vector<1x1x128xf32> to vector<1x128xf32>
    %35 = arith.addf %32, %34 : vector<1x128xf32>
    %36 = vector.broadcast %28 : vector<1x128xf32> to vector<256x128xf32>
    %37 = arith.mulf %15, %36 : vector<256x128xf32>
    %38 = vector.broadcast %35 : vector<1x128xf32> to vector<256x128xf32>
    %39 = arith.addf %37, %38 : vector<256x128xf32>
    %c0_25 = arith.constant 0 : index
    %c0_26 = arith.constant 0 : index
    %c0_27 = arith.constant 0 : index
    %40 = vector.load %arg9[%c0_25, %c0_26, %c0_27] : memref<1x256x128xf32, #tpu.memory_space<vmem>>, vector<1x256x128xf32>
    %41 = vector.shape_cast %40 : vector<1x256x128xf32> to vector<256x128xf32>
    %42 = vector.shape_cast %39 : vector<256x128xf32> to vector<1x256x128xf32>
    tpu.vector_store %arg9[%c0_25, %c0_26, %c0_27], %42 {strides = array<i32>} : memref<1x256x128xf32, #tpu.memory_space<vmem>>, vector<1x256x128xf32>,
    return
  }
  func.func @transform_0(%arg0: i32, %arg1: i32) -> (i32, i32, i32) {
    %c0_i32 = arith.constant 0 : i32
    %c0_i32_0 = arith.constant 0 : i32
    %c0_i32_1 = arith.constant 0 : i32
    return %arg0, %c0_i32, %c0_i32_0 : i32, i32, i32
  }
  func.func @transform_1(%arg0: i32, %arg1: i32) -> (i32, i32) {
    %c0_i32 = arith.constant 0 : i32
    %c0_i32_0 = arith.constant 0 : i32
    return %c0_i32, %arg1 : i32, i32
  }
  func.func @transform_2(%arg0: i32, %arg1: i32) -> (i32, i32) {
    %c0_i32 = arith.constant 0 : i32
    %c0_i32_0 = arith.constant 0 : i32
    return %c0_i32, %arg1 : i32, i32
  }
  func.func @transform_3(%arg0: i32, %arg1: i32) -> (i32, i32, i32) {
    %c0_i32 = arith.constant 0 : i32
    %c0_i32_0 = arith.constant 0 : i32
    return %arg0, %c0_i32, %arg1 : i32, i32, i32
  }
  func.func @transform_4(%arg0: i32, %arg1: i32) -> (i32, i32, i32) {
    %c0_i32 = arith.constant 0 : i32
    %c0_i32_0 = arith.constant 0 : i32
    return %arg0, %c0_i32, %arg1 : i32, i32, i32
  }
  func.func @transform_5(%arg0: i32, %arg1: i32) -> (i32, i32) {
    %c0_i32 = arith.constant 0 : i32
    %c0_i32_0 = arith.constant 0 : i32
    return %c0_i32, %arg1 : i32, i32
  }
  func.func @transform_6(%arg0: i32, %arg1: i32) -> (i32, i32) {
    %c0_i32 = arith.constant 0 : i32
    %c0_i32_0 = arith.constant 0 : i32
    return %c0_i32, %arg1 : i32, i32
  }
  func.func @transform_7(%arg0: i32, %arg1: i32) -> (i32, i32, i32) {
    %c0_i32 = arith.constant 0 : i32
    %c0_i32_0 = arith.constant 0 : i32
    return %arg0, %c0_i32, %arg1 : i32, i32, i32
  }
}

</mosaic_0001>

<llo_original>
// kernel: tpu_custom_call.1
$region0: #{tpu_custom_call.1}
  #allocation0 [shape = 'u32[]', space=smem, size = 0x4, offset = 0x4, fixed_abs, tag = 'smem constant byte address 0x4 - core index']
  #allocation1 [shape = 'u32[144,128]{1,0:T(1,128)}', space=vmem, size = 0x12000, scoped, tag = 'internal scratch']
  %s0 = inlined_call_operand.hbm [shape: f32[2,256,128], index: 0, kind: input, shape index: {}]
  %s1 = inlined_call_operand.hbm [shape: f32[128,128], index: 1, kind: input, shape index: {}]
  %s2 = inlined_call_operand.vmem [shape: f32[1,128], index: 2, kind: input, shape index: {}]
  %s3 = inlined_call_operand.vmem [shape: f32[2,1,128], index: 3, kind: input, shape index: {}]
  %s4 = inlined_call_operand.vmem [shape: f32[2,1,128], index: 4, kind: input, shape index: {}]
  %s5 = inlined_call_operand.vmem [shape: f32[1,128], index: 5, kind: input, shape index: {}]
  %s6 = inlined_call_operand.vmem [shape: f32[1,128], index: 6, kind: input, shape index: {}]
  %s7 = inlined_call_operand.hbm [shape: f32[2,256,128], index: 7, kind: output, shape index: {}]
  %s8 = sld [smem:[#allocation0]]
  $region69: #{tpu_custom_call.1} parent=0
    _
  %s10 = ssub.s32 1, %s8
  %s11 = scalar_select 0, %s10, %s8
  $region1: #{tpu_custom_call.1} parent=0
    #allocation2 [shape = 'u8[262144]{0}', space=vmem, size = 0x40000, scoped, tag = 'input window, operand 0']
    #allocation3 [shape = 's32[2]{0}', space=sflag, size = 0x8, scoped, tag = 'scoped memory for tpu_custom_call.1']
    #allocation4 [shape = 's32[2]{0}', space=sflag, size = 0x8, scoped, tag = 'scoped memory for tpu_custom_call.1']
    #allocation5 [shape = 'u8[65536]{0}', space=vmem, size = 0x10000, scoped, tag = 'input window, operand 1, single buffered']
    #allocation6 [shape = 's32[1]{0}', space=sflag, size = 0x4, scoped, tag = 'scoped memory for tpu_custom_call.1']
    #allocation7 [shape = 'u8[262144]{0}', space=vmem, size = 0x40000, scoped, tag = 'output window, operand 0']
    %12 = vsyncpa [#allocation3], 0
    %s13 = scalar_lea.sflag [#allocation3], 1
    %14 = vsyncpa %s13, 0
    %15 = vsyncpa [#allocation6], 0
    %16 = vsyncpa [#allocation4], 0
    %s17 = scalar_lea.sflag [#allocation4], 1
    %18 = vsyncpa %s17, 0
    loop: start=0, step=1, limit=4
    $region2: #{tpu_custom_call.1} parent=1 // loop_pre_header
      _
    $region3: #{tpu_custom_call.1} parent=1 // loop_header
      %s20 = sphi 0, %s24
      %p21 = scmp.ge.s32.totalorder %s20, 4
      %s27 = sphi 0, %s39
      %s28 = sphi 0, %s35
      %s29 = sphi 0, %s27
      %s30 = sphi 0, %s28
      %s31 = sphi 0, %s29
      %s32 = sphi 0, %s30
      %s42 = sphi 0, %s44
      %s45 = sphi 0, %s42
      %s46 = sphi 0, %s45
      %s62 = sphi 0, %s46
      %s68 = sphi 0, %s70
      %s71 = sphi 0, %s68
      %s72 = sphi 0, %s71
      %s88 = sphi 0, %s72
      %s94 = sphi 0, %s96
      %s97 = sphi 0, %s94
      %s98 = sphi 0, %s97
      %s114 = sphi 0, %s98
      %s122 = sphi 0, %s124
      %s125 = sphi 0, %s122
      %s126 = sphi 0, %s125
      %s142 = sphi 0, %s126
      %s150 = sphi 0, %s152
      %s153 = sphi 0, %s150
      %s154 = sphi 0, %s153
      %s170 = sphi 0, %s154
      %s176 = sphi 0, %s178
      %s179 = sphi 0, %s176
      %s180 = sphi 0, %s179
      %s196 = sphi 0, %s180
      %s202 = sphi 0, %s204
      %s205 = sphi 0, %s202
      %s206 = sphi 0, %s205
      %s222 = sphi 0, %s206
      %s230 = sphi 0, %s232
      %s233 = sphi 0, %s230
      %s234 = sphi 0, %s233
      %s250 = sphi 0, %s234
    $region4: #{tpu_custom_call.1} parent=1 // loop_header_branch
      %23 = sbr.rel (%p21) target = $region8
    $region5: #{tpu_custom_call.1} parent=1 // loop_body
      %s25 = ssub.s32 %s20, 1
      %s26 = ssub.s32 %s20, 2
      %s33 = sadd.s32 1, %s28
      %p34 = scmp.ge.s32.totalorder %s33, 1
      %s35 = scalar_select %p34, 0, %s33
      %s36 = sadd.s32 1, %s27
      %s37 = scalar_select %p34, %s36, %s27
      %p38 = scmp.ge.s32.totalorder %s37, 2
      %s39 = scalar_select %p38, 0, %s37
      %s40 = ssub.s32 %s27, %s39
      %p41 = scmp.eq.s32.totalorder %s40, 0
      %s43 = sadd.s32 %s42, 1
      %s44 = scalar_select %p41, %s42, %s43
      %p47 = pneg %p41
      %p48 = scmp.eq.s32.totalorder %s20, 1
      %p49 = por %p47, %p48
      %p50 = scmp.ne.s32.totalorder %s42, %s45
      %p51 = scmp.eq.s32.totalorder %s20, 0
      %p52 = por %p50, %p51
      %p53 = scmp.ne.s32.totalorder %s42, %s45
      %p54 = scmp.eq.s32.totalorder %s25, 1
      %p55 = por %p53, %p54
      %p56 = scmp.ne.s32.totalorder %s45, %s46
      %p57 = scmp.eq.s32.totalorder %s25, 0
      %p58 = por %p56, %p57
      %p59 = scmp.ne.s32.totalorder %s45, %s46
      %p60 = scmp.eq.s32.totalorder %s26, 1
      %p61 = por %p59, %p60
      %p63 = scmp.ne.s32.totalorder %s46, %s62
      %p64 = scmp.eq.s32.totalorder %s26, 0
      %p65 = por %p63, %p64
      %s66 = ssub.s32 %s28, %s35
      %p67 = scmp.eq.s32.totalorder %s66, 0
      %s69 = sadd.s32 %s68, 1
      %s70 = scalar_select %p67, %s68, %s69
      %p73 = pneg %p67
      %p74 = scmp.eq.s32.totalorder %s20, 1
      %p75 = por %p73, %p74
      %p76 = scmp.ne.s32.totalorder %s68, %s71
      %p77 = scmp.eq.s32.totalorder %s20, 0
      %p78 = por %p76, %p77
      %p79 = scmp.ne.s32.totalorder %s68, %s71
      %p80 = scmp.eq.s32.totalorder %s25, 1
      %p81 = por %p79, %p80
      %p82 = scmp.ne.s32.totalorder %s71, %s72
      %p83 = scmp.eq.s32.totalorder %s25, 0
      %p84 = por %p82, %p83
      %p85 = scmp.ne.s32.totalorder %s71, %s72
      %p86 = scmp.eq.s32.totalorder %s26, 1
      %p87 = por %p85, %p86
      %p89 = scmp.ne.s32.totalorder %s72, %s88
      %p90 = scmp.eq.s32.totalorder %s26, 0
      %p91 = por %p89, %p90
      %s92 = ssub.s32 %s28, %s35
      %p93 = scmp.eq.s32.totalorder %s92, 0
      %s95 = sadd.s32 %s94, 1
      %s96 = scalar_select %p93, %s94, %s95
      %p99 = pneg %p93
      %p100 = scmp.eq.s32.totalorder %s20, 1
      %p101 = por %p99, %p100
      %p102 = scmp.ne.s32.totalorder %s94, %s97
      %p103 = scmp.eq.s32.totalorder %s20, 0
      %p104 = por %p102, %p103
      %p105 = scmp.ne.s32.totalorder %s94, %s97
      %p106 = scmp.eq.s32.totalorder %s25, 1
      %p107 = por %p105, %p106
      %p108 = scmp.ne.s32.totalorder %s97, %s98
      %p109 = scmp.eq.s32.totalorder %s25, 0
      %p110 = por %p108, %p109
      %p111 = scmp.ne.s32.totalorder %s97, %s98
      %p112 = scmp.eq.s32.totalorder %s26, 1
      %p113 = por %p111, %p112
      %p115 = scmp.ne.s32.totalorder %s98, %s114
      %p116 = scmp.eq.s32.totalorder %s26, 0
      %p117 = por %p115, %p116
      %s118 = ssub.s32 %s27, %s39
      %s119 = ssub.s32 %s28, %s35
      %s120 = sor.u32 %s118, %s119
      %p121 = scmp.eq.s32.totalorder %s120, 0
      %s123 = sadd.s32 %s122, 1
      %s124 = scalar_select %p121, %s122, %s123
      %p127 = pneg %p121
      %p128 = scmp.eq.s32.totalorder %s20, 1
      %p129 = por %p127, %p128
      %p130 = scmp.ne.s32.totalorder %s122, %s125
      %p131 = scmp.eq.s32.totalorder %s20, 0
      %p132 = por %p130, %p131
      %p133 = scmp.ne.s32.totalorder %s122, %s125
      %p134 = scmp.eq.s32.totalorder %s25, 1
      %p135 = por %p133, %p134
      %p136 = scmp.ne.s32.totalorder %s125, %s126
      %p137 = scmp.eq.s32.totalorder %s25, 0
      %p138 = por %p136, %p137
      %p139 = scmp.ne.s32.totalorder %s125, %s126
      %p140 = scmp.eq.s32.totalorder %s26, 1
      %p141 = por %p139, %p140
      %p143 = scmp.ne.s32.totalorder %s126, %s142
      %p144 = scmp.eq.s32.totalorder %s26, 0
      %p145 = por %p143, %p144
      %s146 = ssub.s32 %s27, %s39
      %s147 = ssub.s32 %s28, %s35
      %s148 = sor.u32 %s146, %s147
      %p149 = scmp.eq.s32.totalorder %s148, 0
      %s151 = sadd.s32 %s150, 1
      %s152 = scalar_select %p149, %s150, %s151
      %p155 = pneg %p149
      %p156 = scmp.eq.s32.totalorder %s20, 1
      %p157 = por %p155, %p156
      %p158 = scmp.ne.s32.totalorder %s150, %s153
      %p159 = scmp.eq.s32.totalorder %s20, 0
      %p160 = por %p158, %p159
      %p161 = scmp.ne.s32.totalorder %s150, %s153
      %p162 = scmp.eq.s32.totalorder %s25, 1
      %p163 = por %p161, %p162
      %p164 = scmp.ne.s32.totalorder %s153, %s154
      %p165 = scmp.eq.s32.totalorder %s25, 0
      %p166 = por %p164, %p165
      %p167 = scmp.ne.s32.totalorder %s153, %s154
      %p168 = scmp.eq.s32.totalorder %s26, 1
      %p169 = por %p167, %p168
      %p171 = scmp.ne.s32.totalorder %s154, %s170
      %p172 = scmp.eq.s32.totalorder %s26, 0
      %p173 = por %p171, %p172
      %s174 = ssub.s32 %s28, %s35
      %p175 = scmp.eq.s32.totalorder %s174, 0
      %s177 = sadd.s32 %s176, 1
      %s178 = scalar_select %p175, %s176, %s177
      %p181 = pneg %p175
      %p182 = scmp.eq.s32.totalorder %s20, 1
      %p183 = por %p181, %p182
      %p184 = scmp.ne.s32.totalorder %s176, %s179
      %p185 = scmp.eq.s32.totalorder %s20, 0
      %p186 = por %p184, %p185
      %p187 = scmp.ne.s32.totalorder %s176, %s179
      %p188 = scmp.eq.s32.totalorder %s25, 1
      %p189 = por %p187, %p188
      %p190 = scmp.ne.s32.totalorder %s179, %s180
      %p191 = scmp.eq.s32.totalorder %s25, 0
      %p192 = por %p190, %p191
      %p193 = scmp.ne.s32.totalorder %s179, %s180
      %p194 = scmp.eq.s32.totalorder %s26, 1
      %p195 = por %p193, %p194
      %p197 = scmp.ne.s32.totalorder %s180, %s196
      %p198 = scmp.eq.s32.totalorder %s26, 0
      %p199 = por %p197, %p198
      %s200 = ssub.s32 %s28, %s35
      %p201 = scmp.eq.s32.totalorder %s200, 0
      %s203 = sadd.s32 %s202, 1
      %s204 = scalar_select %p201, %s202, %s203
      %p207 = pneg %p201
      %p208 = scmp.eq.s32.totalorder %s20, 1
      %p209 = por %p207, %p208
      %p210 = scmp.ne.s32.totalorder %s202, %s205
      %p211 = scmp.eq.s32.totalorder %s20, 0
      %p212 = por %p210, %p211
      %p213 = scmp.ne.s32.totalorder %s202, %s205
      %p214 = scmp.eq.s32.totalorder %s25, 1
      %p215 = por %p213, %p214
      %p216 = scmp.ne.s32.totalorder %s205, %s206
      %p217 = scmp.eq.s32.totalorder %s25, 0
      %p218 = por %p216, %p217
      %p219 = scmp.ne.s32.totalorder %s205, %s206
      %p220 = scmp.eq.s32.totalorder %s26, 1
      %p221 = por %p219, %p220
      %p223 = scmp.ne.s32.totalorder %s206, %s222
      %p224 = scmp.eq.s32.totalorder %s26, 0
      %p225 = por %p223, %p224
      %s226 = ssub.s32 %s27, %s39
      %s227 = ssub.s32 %s28, %s35
      %s228 = sor.u32 %s226, %s227
      %p229 = scmp.eq.s32.totalorder %s228, 0
      %s231 = sadd.s32 %s230, 1
      %s232 = scalar_select %p229, %s230, %s231
      %p235 = pneg %p229
      %p236 = scmp.eq.s32.totalorder %s20, 1
      %p237 = por %p235, %p236
      %p238 = scmp.ne.s32.totalorder %s230, %s233
      %p239 = scmp.eq.s32.totalorder %s20, 0
      %p240 = por %p238, %p239
      %p241 = scmp.ne.s32.totalorder %s230, %s233
      %p242 = scmp.eq.s32.totalorder %s25, 1
      %p243 = por %p241, %p242
      %p244 = scmp.ne.s32.totalorder %s233, %s234
      %p245 = scmp.eq.s32.totalorder %s25, 0
      %p246 = por %p244, %p245
      %p247 = scmp.ne.s32.totalorder %s233, %s234
      %p248 = scmp.eq.s32.totalorder %s26, 1
      %p249 = por %p247, %p248
      %p251 = scmp.ne.s32.totalorder %s234, %s250
      %p252 = scmp.eq.s32.totalorder %s26, 0
      %p253 = por %p251, %p252
      %p254 = scmp.le.s32.totalorder 1, %s20
      %p255 = scmp.lt.s32.totalorder %s20, 3
      %p256 = pnand %p254, %p255
      %p257 = pneg %p256
      // Predicated region
      $region9: #{tpu_custom_call.1} parent=5 // pred_check
        _
      $region10: #{tpu_custom_call.1} parent=5 // pred_check_branch
        %259 = sbr.rel (%p256) target = $region12
      $region11: #{tpu_custom_call.1} parent=5 // pred_region
        %s260 = ssub.s32 %s20, 1
        // Predicated region
        $region13: #{tpu_custom_call.1} parent=11 // pred_check
          %p261 = pneg %p84
        $region14: #{tpu_custom_call.1} parent=11 // pred_check_branch
          %263 = sbr.rel (%p261) target = $region16
        $region15: #{tpu_custom_call.1} parent=11 // pred_region
          %s265 = ssub.s32 2048, 2048
          %266 = vsyncadd [#allocation6], %s265
          %s267 = smul.addr %s30, 128
          %s268 = scalar_lea.hbm %s1, %s267
          %s269 = sshll.u32 [#allocation5], 4
          %s270 = int_to_ptr.vmem [resolvable:$true] %s269
          %275 = dma.hbm_to_vmem [thread:$0]  %s268, 2048, %s270, [#allocation6], 128, 128, 8
        $region16: #{tpu_custom_call.1} parent=11 // pred_fallthru
          _
        // Predicated region
        $region17: #{tpu_custom_call.1} parent=11 // pred_check
          %p276 = pneg %p110
        $region18: #{tpu_custom_call.1} parent=11 // pred_check_branch
          %278 = sbr.rel (%p276) target = $region20
        $region19: #{tpu_custom_call.1} parent=11 // pred_region
          %p279 = scmp.lt.s32.totalorder %s30, 0
          %s280 = scalar_select %p279, %s30, 0
          %s281 = scalar_lea.vmem %s2, %s280
        $region20: #{tpu_custom_call.1} parent=11 // pred_fallthru
          _
        // Predicated region
        $region21: #{tpu_custom_call.1} parent=11 // pred_check
          %p282 = pneg %p192
        $region22: #{tpu_custom_call.1} parent=11 // pred_check_branch
          %284 = sbr.rel (%p282) target = $region24
        $region23: #{tpu_custom_call.1} parent=11 // pred_region
          %p285 = scmp.lt.s32.totalorder %s30, 0
          %s286 = scalar_select %p285, %s30, 0
          %s287 = scalar_lea.vmem %s5, %s286
        $region24: #{tpu_custom_call.1} parent=11 // pred_fallthru
          _
        // Predicated region
        $region25: #{tpu_custom_call.1} parent=11 // pred_check
          %p288 = pneg %p218
        $region26: #{tpu_custom_call.1} parent=11 // pred_check_branch
          %290 = sbr.rel (%p288) target = $region28
        $region27: #{tpu_custom_call.1} parent=11 // pred_region
          %p291 = scmp.lt.s32.totalorder %s30, 0
          %s292 = scalar_select %p291, %s30, 0
          %s293 = scalar_lea.vmem %s6, %s292
        $region28: #{tpu_custom_call.1} parent=11 // pred_fallthru
          _
      $region12: #{tpu_custom_call.1} parent=5 // pred_fallthru
        _
      %p294 = scmp.lt.s32.totalorder %s20, 2
      // Predicated region
      $region29: #{tpu_custom_call.1} parent=5 // pred_check
        %p295 = pneg %p294
      $region30: #{tpu_custom_call.1} parent=5 // pred_check_branch
        %297 = sbr.rel (%p295) target = $region32
      $region31: #{tpu_custom_call.1} parent=5 // pred_region
        // Predicated region
        $region33: #{tpu_custom_call.1} parent=31 // pred_check
          %p298 = pneg %p52
        $region34: #{tpu_custom_call.1} parent=31 // pred_check_branch
          %300 = sbr.rel (%p298) target = $region36
        $region35: #{tpu_custom_call.1} parent=31 // pred_region
          %s301 = sand.u32 %s42, 1
          %s302 = scalar_lea.sflag [#allocation3], %s301
          %s303 = sand.u32 %s42, 1
          %s304 = smul.addr %s303, 256
          %s305 = scalar_lea.vmem [#allocation2], %s304
          %s307 = ssub.s32 4096, 4096
          %308 = vsyncadd %s302, %s307
          %s309 = smul.addr %s27, 32
          %s310 = smul.addr %s309, 128
          %s311 = scalar_lea.hbm %s0, %s310
          %s312 = sshll.u32 %s305, 4
          %s313 = int_to_ptr.vmem [resolvable:$true] %s312
          %318 = dma.hbm_to_vmem [thread:$0]  %s311, 4096, %s313, %s302, 128, 128, 8
        $region36: #{tpu_custom_call.1} parent=31 // pred_fallthru
          _
        // Predicated region
        $region37: #{tpu_custom_call.1} parent=31 // pred_check
          %p319 = pneg %p132
        $region38: #{tpu_custom_call.1} parent=31 // pred_check_branch
          %321 = sbr.rel (%p319) target = $region40
        $region39: #{tpu_custom_call.1} parent=31 // pred_region
          %p322 = scmp.lt.s32.totalorder %s27, 1
          %s323 = scalar_select %p322, %s27, 1
          %p324 = scmp.lt.s32.totalorder %s28, 0
          %s325 = scalar_select %p324, %s28, 0
          %s326 = sadd.s32 %s325, %s323
          %s327 = scalar_lea.vmem %s3, %s326
        $region40: #{tpu_custom_call.1} parent=31 // pred_fallthru
          _
        // Predicated region
        $region41: #{tpu_custom_call.1} parent=31 // pred_check
          %p328 = pneg %p160
        $region42: #{tpu_custom_call.1} parent=31 // pred_check_branch
          %330 = sbr.rel (%p328) target = $region44
        $region43: #{tpu_custom_call.1} parent=31 // pred_region
          %p331 = scmp.lt.s32.totalorder %s27, 1
          %s332 = scalar_select %p331, %s27, 1
          %p333 = scmp.lt.s32.totalorder %s28, 0
          %s334 = scalar_select %p333, %s28, 0
          %s335 = sadd.s32 %s334, %s332
          %s336 = scalar_lea.vmem %s4, %s335
        $region44: #{tpu_custom_call.1} parent=31 // pred_fallthru
          _
      $region32: #{tpu_custom_call.1} parent=5 // pred_fallthru
        _
      %p337 = scmp.le.s32.totalorder 1, %s20
      %p338 = scmp.lt.s32.totalorder %s20, 3
      %p339 = pnand %p337, %p338
      %p340 = pneg %p339
      // Predicated region
      $region45: #{tpu_custom_call.1} parent=5 // pred_check
        _
      $region46: #{tpu_custom_call.1} parent=5 // pred_check_branch
        %342 = sbr.rel (%p339) target = $region48
      $region47: #{tpu_custom_call.1} parent=5 // pred_region
        %s343 = ssub.s32 %s20, 1
        %s344 = sand.u32 %s45, 1
        %s345 = scalar_lea.sflag [#allocation3], %s344
        %s346 = sand.u32 %s45, 1
        %s347 = smul.addr %s346, 256
        %s348 = scalar_lea.vmem [#allocation2], %s347
        // Predicated region
        $region49: #{tpu_custom_call.1} parent=47 // pred_check
          %p349 = pneg %p58
        $region50: #{tpu_custom_call.1} parent=47 // pred_check_branch
          %351 = sbr.rel (%p349) target = $region52
        $region51: #{tpu_custom_call.1} parent=47 // pred_region
          %352 = dma.done %s345, 4096
        $region52: #{tpu_custom_call.1} parent=47 // pred_fallthru
          _
        // Predicated region
        $region53: #{tpu_custom_call.1} parent=47 // pred_check
          %p353 = pneg %p84
        $region54: #{tpu_custom_call.1} parent=47 // pred_check_branch
          %355 = sbr.rel (%p353) target = $region56
        $region55: #{tpu_custom_call.1} parent=47 // pred_region
          %356 = dma.done [#allocation6], 2048
        $region56: #{tpu_custom_call.1} parent=47 // pred_fallthru
          _
        %s357 = sand.u32 %s45, 1
        %s358 = scalar_lea.sflag [#allocation3], %s357
        %s359 = sand.u32 %s45, 1
        %s360 = smul.addr %s359, 256
        %s361 = scalar_lea.vmem [#allocation2], %s360
        %p362 = pneg %p58
        %p363 = pneg %p55
        %p364 = pneg %p84
        %p365 = pneg %p81
        %p366 = scmp.lt.s32.totalorder %s30, 0
        %s367 = scalar_select %p366, %s30, 0
        %s368 = scalar_lea.vmem %s2, %s367
        %p369 = pneg %p110
        %p370 = pneg %p107
        %p371 = scmp.lt.s32.totalorder %s29, 1
        %s372 = scalar_select %p371, %s29, 1
        %p373 = scmp.lt.s32.totalorder %s30, 0
        %s374 = scalar_select %p373, %s30, 0
        %s375 = sadd.s32 %s374, %s372
        %s376 = scalar_lea.vmem %s3, %s375
        %p377 = pneg %p138
        %p378 = pneg %p135
        %p379 = scmp.lt.s32.totalorder %s29, 1
        %s380 = scalar_select %p379, %s29, 1
        %p381 = scmp.lt.s32.totalorder %s30, 0
        %s382 = scalar_select %p381, %s30, 0
        %s383 = sadd.s32 %s382, %s380
        %s384 = scalar_lea.vmem %s4, %s383
        %p385 = pneg %p166
        %p386 = pneg %p163
        %p387 = scmp.lt.s32.totalorder %s30, 0
        %s388 = scalar_select %p387, %s30, 0
        %s389 = scalar_lea.vmem %s5, %s388
        %p390 = pneg %p192
        %p391 = pneg %p189
        %p392 = scmp.lt.s32.totalorder %s30, 0
        %s393 = scalar_select %p392, %s30, 0
        %s394 = scalar_lea.vmem %s6, %s393
        %p395 = pneg %p218
        %p396 = pneg %p215
        %p397 = pneg %p246
        %p398 = pneg %p243
        %s399 = sand.u32 %s233, 1
        %s400 = scalar_lea.sflag [#allocation4], %s399
        %s401 = sand.u32 %s233, 1
        %s402 = smul.addr %s401, 256
        %s403 = scalar_lea.vmem [#allocation7], %s402
        %p404 = scmp.lt.s32.totalorder %s30, 0
        %s405 = scalar_select %p404, %s30, 0
        %s406 = scalar_lea.vmem %s2, %s405
        %p407 = scmp.lt.s32.totalorder %s29, 1
        %s408 = scalar_select %p407, %s29, 1
        %p409 = scmp.lt.s32.totalorder %s30, 0
        %s410 = scalar_select %p409, %s30, 0
        %s411 = sadd.s32 %s410, %s408
        %s412 = scalar_lea.vmem %s3, %s411
        %p413 = scmp.lt.s32.totalorder %s29, 1
        %s414 = scalar_select %p413, %s29, 1
        %p415 = scmp.lt.s32.totalorder %s30, 0
        %s416 = scalar_select %p415, %s30, 0
        %s417 = sadd.s32 %s416, %s414
        %s418 = scalar_lea.vmem %s4, %s417
        %p419 = scmp.lt.s32.totalorder %s30, 0
        %s420 = scalar_select %p419, %s30, 0
        %s421 = scalar_lea.vmem %s5, %s420
        %p422 = scmp.lt.s32.totalorder %s30, 0
        %s423 = scalar_select %p422, %s30, 0
        %s424 = scalar_lea.vmem %s6, %s423
        %v425 = vld [vmem:[%s348] sm:$0xff]
        %v426 = vld [vmem:[%s348 + $0x8] sm:$0xff]
        %v427 = vld [vmem:[%s348 + $0x10] sm:$0xff]
        %v428 = vld [vmem:[%s348 + $0x18] sm:$0xff]
        %v429 = vld [vmem:[%s348 + $0x20] sm:$0xff]
        %v430 = vld [vmem:[%s348 + $0x28] sm:$0xff]
        %v431 = vld [vmem:[%s348 + $0x30] sm:$0xff]
        %v432 = vld [vmem:[%s348 + $0x38] sm:$0xff]
        %v433 = vld [vmem:[%s348 + $0x40] sm:$0xff]
        %v434 = vld [vmem:[%s348 + $0x48] sm:$0xff]
        %v435 = vld [vmem:[%s348 + $0x50] sm:$0xff]
        %v436 = vld [vmem:[%s348 + $0x58] sm:$0xff]
        %v437 = vld [vmem:[%s348 + $0x60] sm:$0xff]
        %v438 = vld [vmem:[%s348 + $0x68] sm:$0xff]
        %v439 = vld [vmem:[%s348 + $0x70] sm:$0xff]
        %v440 = vld [vmem:[%s348 + $0x78] sm:$0xff]
        %v441 = vld [vmem:[%s348 + $0x80] sm:$0xff]
        %v442 = vld [vmem:[%s348 + $0x88] sm:$0xff]
        %v443 = vld [vmem:[%s348 + $0x90] sm:$0xff]
        %v444 = vld [vmem:[%s348 + $0x98] sm:$0xff]
        %v445 = vld [vmem:[%s348 + $0xa0] sm:$0xff]
        %v446 = vld [vmem:[%s348 + $0xa8] sm:$0xff]
        %v447 = vld [vmem:[%s348 + $0xb0] sm:$0xff]
        %v448 = vld [vmem:[%s348 + $0xb8] sm:$0xff]
        %v449 = vld [vmem:[%s348 + $0xc0] sm:$0xff]
        %v450 = vld [vmem:[%s348 + $0xc8] sm:$0xff]
        %v451 = vld [vmem:[%s348 + $0xd0] sm:$0xff]
        %v452 = vld [vmem:[%s348 + $0xd8] sm:$0xff]
        %v453 = vld [vmem:[%s348 + $0xe0] sm:$0xff]
        %v454 = vld [vmem:[%s348 + $0xe8] sm:$0xff]
        %v455 = vld [vmem:[%s348 + $0xf0] sm:$0xff]
        %v456 = vld [vmem:[%s348 + $0xf8] sm:$0xff]
        %v457 = vld [vmem:[#allocation5] sm:$0xff]
        %v458 = vld [vmem:[#allocation5 + $0x8] sm:$0xff]
        %v459 = vld [vmem:[#allocation5 + $0x10] sm:$0xff]
        %v460 = vld [vmem:[#allocation5 + $0x18] sm:$0xff]
        %v461 = vld [vmem:[#allocation5 + $0x20] sm:$0xff]
        %v462 = vld [vmem:[#allocation5 + $0x28] sm:$0xff]
        %v463 = vld [vmem:[#allocation5 + $0x30] sm:$0xff]
        %v464 = vld [vmem:[#allocation5 + $0x38] sm:$0xff]
        %v465 = vld [vmem:[#allocation5 + $0x40] sm:$0xff]
        %v466 = vld [vmem:[#allocation5 + $0x48] sm:$0xff]
        %v467 = vld [vmem:[#allocation5 + $0x50] sm:$0xff]
        %v468 = vld [vmem:[#allocation5 + $0x58] sm:$0xff]
        %v469 = vld [vmem:[#allocation5 + $0x60] sm:$0xff]
        %v470 = vld [vmem:[#allocation5 + $0x68] sm:$0xff]
        %v471 = vld [vmem:[#allocation5 + $0x70] sm:$0xff]
        %v472 = vld [vmem:[#allocation5 + $0x78] sm:$0xff]
        %v473 = vld [vmem:[%s406] sm:$0x1]
        %v475 = vlaneseq
        %v476 = vshrl.u32 %v475, 7
        %v477 = vsub.s32 0, %v476
        %v478 = vrot.slane %v473, %v477
        %480 = vmatprep.subr.mxu0 0.0
        %481 = vmatpush1.msra.mxu0 %v472
        %482 = vmatprep.subr.mxu0 0.0
        %483 = vmatpush1.msra.mxu0 %v471
        %484 = vmatprep.subr.mxu0 0.0
        %485 = vmatpush1.msra.mxu0 %v470
        %486 = vmatprep.subr.mxu0 0.0
        %487 = vmatpush1.msra.mxu0 %v469
        %488 = vmatprep.subr.mxu0 0.0
        %489 = vmatpush1.msra.mxu0 %v468
        %490 = vmatprep.subr.mxu0 0.0
        %491 = vmatpush1.msra.mxu0 %v467
        %492 = vmatprep.subr.mxu0 0.0
        %493 = vmatpush1.msra.mxu0 %v466
        %494 = vmatprep.subr.mxu0 0.0
        %495 = vmatpush1.msra.mxu0 %v465
        %496 = vmatprep.subr.mxu0 0.0
        %497 = vmatpush1.msra.mxu0 %v464
        %498 = vmatprep.subr.mxu0 0.0
        %499 = vmatpush1.msra.mxu0 %v463
        %500 = vmatprep.subr.mxu0 0.0
        %501 = vmatpush1.msra.mxu0 %v462
        %502 = vmatprep.subr.mxu0 0.0
        %503 = vmatpush1.msra.mxu0 %v461
        %504 = vmatprep.subr.mxu0 0.0
        %505 = vmatpush1.msra.mxu0 %v460
        %506 = vmatprep.subr.mxu0 0.0
        %507 = vmatpush1.msra.mxu0 %v459
        %508 = vmatprep.subr.mxu0 0.0
        %509 = vmatpush1.msra.mxu0 %v458
        %510 = vmatprep.subr.mxu0 0.0
        %511 = vmatpush1.msra.mxu0 %v457
        %512 = vmatprep.subr.mxu0 0.0
        %513 = vmatpush2.msra.mxu0 0.0
        %514 = vmatprep.subr.mxu0 0.0
        %515 = vmatpush2.msra.mxu0 0.0
        %516 = vmatprep.subr.mxu0 0.0
        %517 = vmatpush2.msra.mxu0 0.0
        %518 = vmatprep.subr.mxu0 0.0
        %519 = vmatpush2.msra.mxu0 0.0
        %520 = vmatprep.subr.mxu0 0.0
        %521 = vmatpush2.msra.mxu0 0.0
        %522 = vmatprep.subr.mxu0 0.0
        %523 = vmatpush2.msra.mxu0 0.0
        %524 = vmatprep.subr.mxu0 0.0
        %525 = vmatpush2.msra.mxu0 0.0
        %526 = vmatprep.subr.mxu0 0.0
        %527 = vmatpush2.msra.mxu0 0.0
        %528 = vmatprep.subr.mxu0 0.0
        %529 = vmatpush2.msra.mxu0 0.0
        %530 = vmatprep.subr.mxu0 0.0
        %531 = vmatpush2.msra.mxu0 0.0
        %532 = vmatprep.subr.mxu0 0.0
        %533 = vmatpush2.msra.mxu0 0.0
        %534 = vmatprep.subr.mxu0 0.0
        %535 = vmatpush2.msra.mxu0 0.0
        %536 = vmatprep.subr.mxu0 0.0
        %537 = vmatpush2.msra.mxu0 0.0
        %538 = vmatprep.subr.mxu0 0.0
        %539 = vmatpush2.msra.mxu0 0.0
        %540 = vmatprep.subr.mxu0 0.0
        %541 = vmatpush2.msra.mxu0 0.0
        %542 = vmatprep.subr.mxu0 0.0
        %543 = vmatpush2.msra.mxu0 0.0
        %544 = vmatprep.mubr.f32.mxu0 0.0
        %545 = vmatmul.mubr.f32.gmra.mxu0 %v425
        %v546 = vpop.f32.mrf.mxu0
        %v547 = vadd.f32 %v478, %v546
        %v548 = vpop.f32.mrf.mxu0
        %549 = vmatprep.mubr.f32.mxu0 0.0
        %550 = vmatmul.mubr.f32.gmra.mxu0 %v426
        %v551 = vpop.f32.mrf.mxu0
        %v552 = vadd.f32 %v478, %v551
        %v553 = vpop.f32.mrf.mxu0
        %554 = vmatprep.mubr.f32.mxu0 0.0
        %555 = vmatmul.mubr.f32.gmra.mxu0 %v427
        %v556 = vpop.f32.mrf.mxu0
        %v557 = vadd.f32 %v478, %v556
        %v558 = vpop.f32.mrf.mxu0
        %559 = vmatprep.mubr.f32.mxu0 0.0
        %560 = vmatmul.mubr.f32.gmra.mxu0 %v428
        %v561 = vpop.f32.mrf.mxu0
        %v562 = vadd.f32 %v478, %v561
        %v563 = vpop.f32.mrf.mxu0
        %564 = vmatprep.mubr.f32.mxu0 0.0
        %565 = vmatmul.mubr.f32.gmra.mxu0 %v429
        %v566 = vpop.f32.mrf.mxu0
        %v567 = vadd.f32 %v478, %v566
        %v568 = vpop.f32.mrf.mxu0
        %569 = vmatprep.mubr.f32.mxu0 0.0
        %570 = vmatmul.mubr.f32.gmra.mxu0 %v430
        %v571 = vpop.f32.mrf.mxu0
        %v572 = vadd.f32 %v478, %v571
        %v573 = vpop.f32.mrf.mxu0
        %574 = vmatprep.mubr.f32.mxu0 0.0
        %575 = vmatmul.mubr.f32.gmra.mxu0 %v431
        %v576 = vpop.f32.mrf.mxu0
        %v577 = vadd.f32 %v478, %v576
        %v578 = vpop.f32.mrf.mxu0
        %579 = vmatprep.mubr.f32.mxu0 0.0
        %580 = vmatmul.mubr.f32.gmra.mxu0 %v432
        %v581 = vpop.f32.mrf.mxu0
        %v582 = vadd.f32 %v478, %v581
        %v583 = vpop.f32.mrf.mxu0
        %584 = vmatprep.mubr.f32.mxu0 0.0
        %585 = vmatmul.mubr.f32.gmra.mxu0 %v433
        %v586 = vpop.f32.mrf.mxu0
        %v587 = vadd.f32 %v478, %v586
        %v588 = vpop.f32.mrf.mxu0
        %589 = vmatprep.mubr.f32.mxu0 0.0
        %590 = vmatmul.mubr.f32.gmra.mxu0 %v434
        %v591 = vpop.f32.mrf.mxu0
        %v592 = vadd.f32 %v478, %v591
        %v593 = vpop.f32.mrf.mxu0
        %594 = vmatprep.mubr.f32.mxu0 0.0
        %595 = vmatmul.mubr.f32.gmra.mxu0 %v435
        %v596 = vpop.f32.mrf.mxu0
        %v597 = vadd.f32 %v478, %v596
        %v598 = vpop.f32.mrf.mxu0
        %599 = vmatprep.mubr.f32.mxu0 0.0
        %600 = vmatmul.mubr.f32.gmra.mxu0 %v436
        %v601 = vpop.f32.mrf.mxu0
        %v602 = vadd.f32 %v478, %v601
        %v603 = vpop.f32.mrf.mxu0
        %604 = vmatprep.mubr.f32.mxu0 0.0
        %605 = vmatmul.mubr.f32.gmra.mxu0 %v437
        %v606 = vpop.f32.mrf.mxu0
        %v607 = vadd.f32 %v478, %v606
        %v608 = vpop.f32.mrf.mxu0
        %609 = vmatprep.mubr.f32.mxu0 0.0
        %610 = vmatmul.mubr.f32.gmra.mxu0 %v438
        %v611 = vpop.f32.mrf.mxu0
        %v612 = vadd.f32 %v478, %v611
        %v613 = vpop.f32.mrf.mxu0
        %614 = vmatprep.mubr.f32.mxu0 0.0
        %615 = vmatmul.mubr.f32.gmra.mxu0 %v439
        %v616 = vpop.f32.mrf.mxu0
        %v617 = vadd.f32 %v478, %v616
        %v618 = vpop.f32.mrf.mxu0
        %619 = vmatprep.mubr.f32.mxu0 0.0
        %620 = vmatmul.mubr.f32.gmra.mxu0 %v440
        %v621 = vpop.f32.mrf.mxu0
        %v622 = vadd.f32 %v478, %v621
        %v623 = vpop.f32.mrf.mxu0
        %624 = vmatprep.mubr.f32.mxu0 0.0
        %625 = vmatmul.mubr.f32.gmra.mxu0 %v441
        %v626 = vpop.f32.mrf.mxu0
        %v627 = vadd.f32 %v478, %v626
        %v628 = vpop.f32.mrf.mxu0
        %629 = vmatprep.mubr.f32.mxu0 0.0
        %630 = vmatmul.mubr.f32.gmra.mxu0 %v442
        %v631 = vpop.f32.mrf.mxu0
        %v632 = vadd.f32 %v478, %v631
        %v633 = vpop.f32.mrf.mxu0
        %634 = vmatprep.mubr.f32.mxu0 0.0
        %635 = vmatmul.mubr.f32.gmra.mxu0 %v443
        %v636 = vpop.f32.mrf.mxu0
        %v637 = vadd.f32 %v478, %v636
        %v638 = vpop.f32.mrf.mxu0
        %639 = vmatprep.mubr.f32.mxu0 0.0
        %640 = vmatmul.mubr.f32.gmra.mxu0 %v444
        %v641 = vpop.f32.mrf.mxu0
        %v642 = vadd.f32 %v478, %v641
        %v643 = vpop.f32.mrf.mxu0
        %644 = vmatprep.mubr.f32.mxu0 0.0
        %645 = vmatmul.mubr.f32.gmra.mxu0 %v445
        %v646 = vpop.f32.mrf.mxu0
        %v647 = vadd.f32 %v478, %v646
        %v648 = vpop.f32.mrf.mxu0
        %649 = vmatprep.mubr.f32.mxu0 0.0
        %650 = vmatmul.mubr.f32.gmra.mxu0 %v446
        %v651 = vpop.f32.mrf.mxu0
        %v652 = vadd.f32 %v478, %v651
        %v653 = vpop.f32.mrf.mxu0
        %654 = vmatprep.mubr.f32.mxu0 0.0
        %655 = vmatmul.mubr.f32.gmra.mxu0 %v447
        %v656 = vpop.f32.mrf.mxu0
        %v657 = vadd.f32 %v478, %v656
        %v658 = vpop.f32.mrf.mxu0
        %659 = vmatprep.mubr.f32.mxu0 0.0
        %660 = vmatmul.mubr.f32.gmra.mxu0 %v448
        %v661 = vpop.f32.mrf.mxu0
        %v662 = vadd.f32 %v478, %v661
        %v663 = vpop.f32.mrf.mxu0
        %664 = vmatprep.mubr.f32.mxu0 0.0
        %665 = vmatmul.mubr.f32.gmra.mxu0 %v449
        %v666 = vpop.f32.mrf.mxu0
        %v667 = vadd.f32 %v478, %v666
        %v668 = vpop.f32.mrf.mxu0
        %669 = vmatprep.mubr.f32.mxu0 0.0
        %670 = vmatmul.mubr.f32.gmra.mxu0 %v450
        %v671 = vpop.f32.mrf.mxu0
        %v672 = vadd.f32 %v478, %v671
        %v673 = vpop.f32.mrf.mxu0
        %674 = vmatprep.mubr.f32.mxu0 0.0
        %675 = vmatmul.mubr.f32.gmra.mxu0 %v451
        %v676 = vpop.f32.mrf.mxu0
        %v677 = vadd.f32 %v478, %v676
        %v678 = vpop.f32.mrf.mxu0
        %679 = vmatprep.mubr.f32.mxu0 0.0
        %680 = vmatmul.mubr.f32.gmra.mxu0 %v452
        %v681 = vpop.f32.mrf.mxu0
        %v682 = vadd.f32 %v478, %v681
        %v683 = vpop.f32.mrf.mxu0
        %684 = vmatprep.mubr.f32.mxu0 0.0
        %685 = vmatmul.mubr.f32.gmra.mxu0 %v453
        %v686 = vpop.f32.mrf.mxu0
        %v687 = vadd.f32 %v478, %v686
        %v688 = vpop.f32.mrf.mxu0
        %689 = vmatprep.mubr.f32.mxu0 0.0
        %690 = vmatmul.mubr.f32.gmra.mxu0 %v454
        %v691 = vpop.f32.mrf.mxu0
        %v692 = vadd.f32 %v478, %v691
        %v693 = vpop.f32.mrf.mxu0
        %694 = vmatprep.mubr.f32.mxu0 0.0
        %695 = vmatmul.mubr.f32.gmra.mxu0 %v455
        %v696 = vpop.f32.mrf.mxu0
        %v697 = vadd.f32 %v478, %v696
        %v698 = vpop.f32.mrf.mxu0
        %699 = vmatprep.mubr.f32.mxu0 0.0
        %700 = vmatmul.mubr.f32.gmra.mxu0 %v456
        %v701 = vpop.f32.mrf.mxu0
        %v702 = vadd.f32 %v478, %v701
        %v703 = vpop.f32.mrf.mxu0
        %704 = vdwg.mxu0
        %v705 = vmul.f32 %v547, 0.01
        %v706 = vmul.f32 %v552, 0.01
        %v707 = vmul.f32 %v557, 0.01
        %v708 = vmul.f32 %v562, 0.01
        %v709 = vmul.f32 %v567, 0.01
        %v710 = vmul.f32 %v572, 0.01
        %v711 = vmul.f32 %v577, 0.01
        %v712 = vmul.f32 %v582, 0.01
        %v713 = vmul.f32 %v587, 0.01
        %v714 = vmul.f32 %v592, 0.01
        %v715 = vmul.f32 %v597, 0.01
        %v716 = vmul.f32 %v602, 0.01
        %v717 = vmul.f32 %v607, 0.01
        %v718 = vmul.f32 %v612, 0.01
        %v719 = vmul.f32 %v617, 0.01
        %v720 = vmul.f32 %v622, 0.01
        %v721 = vmul.f32 %v627, 0.01
        %v722 = vmul.f32 %v632, 0.01
        %v723 = vmul.f32 %v637, 0.01
        %v724 = vmul.f32 %v642, 0.01
        %v725 = vmul.f32 %v647, 0.01
        %v726 = vmul.f32 %v652, 0.01
        %v727 = vmul.f32 %v657, 0.01
        %v728 = vmul.f32 %v662, 0.01
        %v729 = vmul.f32 %v667, 0.01
        %v730 = vmul.f32 %v672, 0.01
        %v731 = vmul.f32 %v677, 0.01
        %v732 = vmul.f32 %v682, 0.01
        %v733 = vmul.f32 %v687, 0.01
        %v734 = vmul.f32 %v692, 0.01
        %v735 = vmul.f32 %v697, 0.01
        %v736 = vmul.f32 %v702, 0.01
        %v737 = vmax.f32 %v547, %v705
        %v738 = vmax.f32 %v552, %v706
        %v739 = vmax.f32 %v557, %v707
        %v740 = vmax.f32 %v562, %v708
        %v741 = vmax.f32 %v567, %v709
        %v742 = vmax.f32 %v572, %v710
        %v743 = vmax.f32 %v577, %v711
        %v744 = vmax.f32 %v582, %v712
        %v745 = vmax.f32 %v587, %v713
        %v746 = vmax.f32 %v592, %v714
        %v747 = vmax.f32 %v597, %v715
        %v748 = vmax.f32 %v602, %v716
        %v749 = vmax.f32 %v607, %v717
        %v750 = vmax.f32 %v612, %v718
        %v751 = vmax.f32 %v617, %v719
        %v752 = vmax.f32 %v622, %v720
        %v753 = vmax.f32 %v627, %v721
        %v754 = vmax.f32 %v632, %v722
        %v755 = vmax.f32 %v637, %v723
        %v756 = vmax.f32 %v642, %v724
        %v757 = vmax.f32 %v647, %v725
        %v758 = vmax.f32 %v652, %v726
        %v759 = vmax.f32 %v657, %v727
        %v760 = vmax.f32 %v662, %v728
        %v761 = vmax.f32 %v667, %v729
        %v762 = vmax.f32 %v672, %v730
        %v763 = vmax.f32 %v677, %v731
        %v764 = vmax.f32 %v682, %v732
        %v765 = vmax.f32 %v687, %v733
        %v766 = vmax.f32 %v692, %v734
        %v767 = vmax.f32 %v697, %v735
        %v768 = vmax.f32 %v702, %v736
        %v769 = vadd.f32 %v737, %v738
        %v770 = vadd.f32 %v769, %v739
        %v771 = vadd.f32 %v770, %v740
        %v772 = vadd.f32 %v771, %v741
        %v773 = vadd.f32 %v772, %v742
        %v774 = vadd.f32 %v773, %v743
        %v775 = vadd.f32 %v774, %v744
        %v776 = vadd.f32 %v775, %v745
        %v777 = vadd.f32 %v776, %v746
        %v778 = vadd.f32 %v777, %v747
        %v779 = vadd.f32 %v778, %v748
        %v780 = vadd.f32 %v779, %v749
        %v781 = vadd.f32 %v780, %v750
        %v782 = vadd.f32 %v781, %v751
        %v783 = vadd.f32 %v782, %v752
        %v784 = vadd.f32 %v783, %v753
        %v785 = vadd.f32 %v784, %v754
        %v786 = vadd.f32 %v785, %v755
        %v787 = vadd.f32 %v786, %v756
        %v788 = vadd.f32 %v787, %v757
        %v789 = vadd.f32 %v788, %v758
        %v790 = vadd.f32 %v789, %v759
        %v791 = vadd.f32 %v790, %v760
        %v792 = vadd.f32 %v791, %v761
        %v793 = vadd.f32 %v792, %v762
        %v794 = vadd.f32 %v793, %v763
        %v795 = vadd.f32 %v794, %v764
        %v796 = vadd.f32 %v795, %v765
        %v797 = vadd.f32 %v796, %v766
        %v798 = vadd.f32 %v797, %v767
        %v799 = vadd.f32 %v798, %v768
        %v800 = vrot.slane %v799, 4
        %v801 = vadd.f32 %v799, %v800
        %v802 = vrot.slane %v801, 2
        %v803 = vadd.f32 %v801, %v802
        %v804 = vrot.slane %v803, 1
        %v805 = vadd.f32 %v803, %v804
        %v806 = vmul.f32 %v805, 0.00390625
        %v807 = vsub.f32 %v737, %v806
        %v808 = vsub.f32 %v738, %v806
        %v809 = vsub.f32 %v739, %v806
        %v810 = vsub.f32 %v740, %v806
        %v811 = vsub.f32 %v741, %v806
        %v812 = vsub.f32 %v742, %v806
        %v813 = vsub.f32 %v743, %v806
        %v814 = vsub.f32 %v744, %v806
        %v815 = vsub.f32 %v745, %v806
        %v816 = vsub.f32 %v746, %v806
        %v817 = vsub.f32 %v747, %v806
        %v818 = vsub.f32 %v748, %v806
        %v819 = vsub.f32 %v749, %v806
        %v820 = vsub.f32 %v750, %v806
        %v821 = vsub.f32 %v751, %v806
        %v822 = vsub.f32 %v752, %v806
        %v823 = vsub.f32 %v753, %v806
        %v824 = vsub.f32 %v754, %v806
        %v825 = vsub.f32 %v755, %v806
        %v826 = vsub.f32 %v756, %v806
        %v827 = vsub.f32 %v757, %v806
        %v828 = vsub.f32 %v758, %v806
        %v829 = vsub.f32 %v759, %v806
        %v830 = vsub.f32 %v760, %v806
        %v831 = vsub.f32 %v761, %v806
        %v832 = vsub.f32 %v762, %v806
        %v833 = vsub.f32 %v763, %v806
        %v834 = vsub.f32 %v764, %v806
        %v835 = vsub.f32 %v765, %v806
        %v836 = vsub.f32 %v766, %v806
        %v837 = vsub.f32 %v767, %v806
        %v838 = vsub.f32 %v768, %v806
        %v839 = vmul.f32 %v807, %v807
        %v840 = vmul.f32 %v808, %v808
        %v841 = vmul.f32 %v809, %v809
        %v842 = vmul.f32 %v810, %v810
        %v843 = vmul.f32 %v811, %v811
        %v844 = vmul.f32 %v812, %v812
        %v845 = vmul.f32 %v813, %v813
        %v846 = vmul.f32 %v814, %v814
        %v847 = vmul.f32 %v815, %v815
        %v848 = vmul.f32 %v816, %v816
        %v849 = vmul.f32 %v817, %v817
        %v850 = vmul.f32 %v818, %v818
        %v851 = vmul.f32 %v819, %v819
        %v852 = vmul.f32 %v820, %v820
        %v853 = vmul.f32 %v821, %v821
        %v854 = vmul.f32 %v822, %v822
        %v855 = vmul.f32 %v823, %v823
        %v856 = vmul.f32 %v824, %v824
        %v857 = vmul.f32 %v825, %v825
        %v858 = vmul.f32 %v826, %v826
        %v859 = vmul.f32 %v827, %v827
        %v860 = vmul.f32 %v828, %v828
        %v861 = vmul.f32 %v829, %v829
        %v862 = vmul.f32 %v830, %v830
        %v863 = vmul.f32 %v831, %v831
        %v864 = vmul.f32 %v832, %v832
        %v865 = vmul.f32 %v833, %v833
        %v866 = vmul.f32 %v834, %v834
        %v867 = vmul.f32 %v835, %v835
        %v868 = vmul.f32 %v836, %v836
        %v869 = vmul.f32 %v837, %v837
        %v870 = vmul.f32 %v838, %v838
        %v871 = vadd.f32 %v839, %v840
        %v872 = vadd.f32 %v871, %v841
        %v873 = vadd.f32 %v872, %v842
        %v874 = vadd.f32 %v873, %v843
        %v875 = vadd.f32 %v874, %v844
        %v876 = vadd.f32 %v875, %v845
        %v877 = vadd.f32 %v876, %v846
        %v878 = vadd.f32 %v877, %v847
        %v879 = vadd.f32 %v878, %v848
        %v880 = vadd.f32 %v879, %v849
        %v881 = vadd.f32 %v880, %v850
        %v882 = vadd.f32 %v881, %v851
        %v883 = vadd.f32 %v882, %v852
        %v884 = vadd.f32 %v883, %v853
        %v885 = vadd.f32 %v884, %v854
        %v886 = vadd.f32 %v885, %v855
        %v887 = vadd.f32 %v886, %v856
        %v888 = vadd.f32 %v887, %v857
        %v889 = vadd.f32 %v888, %v858
        %v890 = vadd.f32 %v889, %v859
        %v891 = vadd.f32 %v890, %v860
        %v892 = vadd.f32 %v891, %v861
        %v893 = vadd.f32 %v892, %v862
        %v894 = vadd.f32 %v893, %v863
        %v895 = vadd.f32 %v894, %v864
        %v896 = vadd.f32 %v895, %v865
        %v897 = vadd.f32 %v896, %v866
        %v898 = vadd.f32 %v897, %v867
        %v899 = vadd.f32 %v898, %v868
        %v900 = vadd.f32 %v899, %v869
        %v901 = vadd.f32 %v900, %v870
        %v902 = vrot.slane %v901, 4
        %v903 = vadd.f32 %v901, %v902
        %v904 = vrot.slane %v903, 2
        %v905 = vadd.f32 %v903, %v904
        %v906 = vrot.slane %v905, 1
        %v907 = vadd.f32 %v905, %v906
        %v908 = vmul.f32 %v907, 0.00390625
        %v909 = vadd.f32 %v908, 1e-05
        %v910 = vrsqrt.pop %v909
        %v911 = vld [vmem:[%s421] sm:$0x1]
        %v912 = vmul.f32 %v911, %v910
        %v913 = vld [vmem:[%s418] sm:$0x1]
        %v914 = vmul.f32 %v912, %v913
        %v915 = vld [vmem:[%s424] sm:$0x1]
        %v916 = vmul.f32 %v915, %v913
        %v917 = vld [vmem:[%s412] sm:$0x1]
        %v918 = vadd.f32 %v916, %v917
        %v920 = vlaneseq
        %v921 = vshrl.u32 %v920, 7
        %v922 = vsub.s32 0, %v921
        %v923 = vrot.slane %v914, %v922
        %v925 = vmul.f32 %v807, %v923
        %v926 = vmul.f32 %v808, %v923
        %v927 = vmul.f32 %v809, %v923
        %v928 = vmul.f32 %v810, %v923
        %v929 = vmul.f32 %v811, %v923
        %v930 = vmul.f32 %v812, %v923
        %v931 = vmul.f32 %v813, %v923
        %v932 = vmul.f32 %v814, %v923
        %v933 = vmul.f32 %v815, %v923
        %v934 = vmul.f32 %v816, %v923
        %v935 = vmul.f32 %v817, %v923
        %v936 = vmul.f32 %v818, %v923
        %v937 = vmul.f32 %v819, %v923
        %v938 = vmul.f32 %v820, %v923
        %v939 = vmul.f32 %v821, %v923
        %v940 = vmul.f32 %v822, %v923
        %v941 = vmul.f32 %v823, %v923
        %v942 = vmul.f32 %v824, %v923
        %v943 = vmul.f32 %v825, %v923
        %v944 = vmul.f32 %v826, %v923
        %v945 = vmul.f32 %v827, %v923
        %v946 = vmul.f32 %v828, %v923
        %v947 = vmul.f32 %v829, %v923
        %v948 = vmul.f32 %v830, %v923
        %v949 = vmul.f32 %v831, %v923
        %v950 = vmul.f32 %v832, %v923
        %v951 = vmul.f32 %v833, %v923
        %v952 = vmul.f32 %v834, %v923
        %v953 = vmul.f32 %v835, %v923
        %v954 = vmul.f32 %v836, %v923
        %v955 = vmul.f32 %v837, %v923
        %v956 = vmul.f32 %v838, %v923
        %v958 = vlaneseq
        %v959 = vshrl.u32 %v958, 7
        %v960 = vsub.s32 0, %v959
        %v961 = vrot.slane %v918, %v960
        %v963 = vadd.f32 %v925, %v961
        %v964 = vadd.f32 %v926, %v961
        %v965 = vadd.f32 %v927, %v961
        %v966 = vadd.f32 %v928, %v961
        %v967 = vadd.f32 %v929, %v961
        %v968 = vadd.f32 %v930, %v961
        %v969 = vadd.f32 %v931, %v961
        %v970 = vadd.f32 %v932, %v961
        %v971 = vadd.f32 %v933, %v961
        %v972 = vadd.f32 %v934, %v961
        %v973 = vadd.f32 %v935, %v961
        %v974 = vadd.f32 %v936, %v961
        %v975 = vadd.f32 %v937, %v961
        %v976 = vadd.f32 %v938, %v961
        %v977 = vadd.f32 %v939, %v961
        %v978 = vadd.f32 %v940, %v961
        %v979 = vadd.f32 %v941, %v961
        %v980 = vadd.f32 %v942, %v961
        %v981 = vadd.f32 %v943, %v961
        %v982 = vadd.f32 %v944, %v961
        %v983 = vadd.f32 %v945, %v961
        %v984 = vadd.f32 %v946, %v961
        %v985 = vadd.f32 %v947, %v961
        %v986 = vadd.f32 %v948, %v961
        %v987 = vadd.f32 %v949, %v961
        %v988 = vadd.f32 %v950, %v961
        %v989 = vadd.f32 %v951, %v961
        %v990 = vadd.f32 %v952, %v961
        %v991 = vadd.f32 %v953, %v961
        %v992 = vadd.f32 %v954, %v961
        %v993 = vadd.f32 %v955, %v961
        %v994 = vadd.f32 %v956, %v961
        %995 = vst [vmem:[%s403] sm:$0xff] %v963
        %996 = vst [vmem:[%s403 + $0x8] sm:$0xff] %v964
        %997 = vst [vmem:[%s403 + $0x10] sm:$0xff] %v965
        %998 = vst [vmem:[%s403 + $0x18] sm:$0xff] %v966
        %999 = vst [vmem:[%s403 + $0x20] sm:$0xff] %v967
        %1000 = vst [vmem:[%s403 + $0x28] sm:$0xff] %v968
        %1001 = vst [vmem:[%s403 + $0x30] sm:$0xff] %v969
        %1002 = vst [vmem:[%s403 + $0x38] sm:$0xff] %v970
        %1003 = vst [vmem:[%s403 + $0x40] sm:$0xff] %v971
        %1004 = vst [vmem:[%s403 + $0x48] sm:$0xff] %v972
        %1005 = vst [vmem:[%s403 + $0x50] sm:$0xff] %v973
        %1006 = vst [vmem:[%s403 + $0x58] sm:$0xff] %v974
        %1007 = vst [vmem:[%s403 + $0x60] sm:$0xff] %v975
        %1008 = vst [vmem:[%s403 + $0x68] sm:$0xff] %v976
        %1009 = vst [vmem:[%s403 + $0x70] sm:$0xff] %v977
        %1010 = vst [vmem:[%s403 + $0x78] sm:$0xff] %v978
        %1011 = vst [vmem:[%s403 + $0x80] sm:$0xff] %v979
        %1012 = vst [vmem:[%s403 + $0x88] sm:$0xff] %v980
        %1013 = vst [vmem:[%s403 + $0x90] sm:$0xff] %v981
        %1014 = vst [vmem:[%s403 + $0x98] sm:$0xff] %v982
        %1015 = vst [vmem:[%s403 + $0xa0] sm:$0xff] %v983
        %1016 = vst [vmem:[%s403 + $0xa8] sm:$0xff] %v984
        %1017 = vst [vmem:[%s403 + $0xb0] sm:$0xff] %v985
        %1018 = vst [vmem:[%s403 + $0xb8] sm:$0xff] %v986
        %1019 = vst [vmem:[%s403 + $0xc0] sm:$0xff] %v987
        %1020 = vst [vmem:[%s403 + $0xc8] sm:$0xff] %v988
        %1021 = vst [vmem:[%s403 + $0xd0] sm:$0xff] %v989
        %1022 = vst [vmem:[%s403 + $0xd8] sm:$0xff] %v990
        %1023 = vst [vmem:[%s403 + $0xe0] sm:$0xff] %v991
        %1024 = vst [vmem:[%s403 + $0xe8] sm:$0xff] %v992
        %1025 = vst [vmem:[%s403 + $0xf0] sm:$0xff] %v993
        %1026 = vst [vmem:[%s403 + $0xf8] sm:$0xff] %v994
        %s1027 = sand.u32 %s233, 1
        %s1028 = scalar_lea.sflag [#allocation4], %s1027
        %s1029 = sand.u32 %s233, 1
        %s1030 = smul.addr %s1029, 256
        %s1031 = scalar_lea.vmem [#allocation7], %s1030
        // Predicated region
        $region57: #{tpu_custom_call.1} parent=47 // pred_check
          %p1032 = pneg %p243
        $region58: #{tpu_custom_call.1} parent=47 // pred_check_branch
          %1034 = sbr.rel (%p1032) target = $region60
        $region59: #{tpu_custom_call.1} parent=47 // pred_region
          %s1036 = ssub.s32 4096, 4096
          %1037 = vsyncadd %s1028, %s1036
          %s1038 = smul.addr %s29, 32
          %s1039 = sadd.s32 %s30, %s1038
          %s1040 = smul.addr %s1039, 128
          %s1041 = scalar_lea.hbm %s7, %s1040
          %s1042 = sshll.u32 %s1031, 4
          %s1043 = int_to_ptr.vmem [resolvable:$true] %s1042
          %1048 = dma.vmem_to_hbm [thread:$0]  %s1043, 4096, %s1041, %s1028, 128, 128, 8
        $region60: #{tpu_custom_call.1} parent=47 // pred_fallthru
          _
      $region48: #{tpu_custom_call.1} parent=5 // pred_fallthru
        _
      %p1049 = scmp.le.s32.totalorder 2, %s20
      // Predicated region
      $region61: #{tpu_custom_call.1} parent=5 // pred_check
        %p1050 = pneg %p1049
      $region62: #{tpu_custom_call.1} parent=5 // pred_check_branch
        %1052 = sbr.rel (%p1050) target = $region64
      $region63: #{tpu_custom_call.1} parent=5 // pred_region
        %s1053 = ssub.s32 %s20, 2
        // Predicated region
        $region65: #{tpu_custom_call.1} parent=63 // pred_check
          %p1054 = pneg %p249
        $region66: #{tpu_custom_call.1} parent=63 // pred_check_branch
          %1056 = sbr.rel (%p1054) target = $region68
        $region67: #{tpu_custom_call.1} parent=63 // pred_region
          %s1057 = sand.u32 %s234, 1
          %s1058 = scalar_lea.sflag [#allocation4], %s1057
          %s1059 = sand.u32 %s234, 1
          %s1060 = smul.addr %s1059, 256
          %s1061 = scalar_lea.vmem [#allocation7], %s1060
          %1062 = dma.done %s1058, 4096
        $region68: #{tpu_custom_call.1} parent=63 // pred_fallthru
          _
      $region64: #{tpu_custom_call.1} parent=5 // pred_fallthru
        _
    $region6: #{tpu_custom_call.1} parent=1 // loop_footer
      %s24 = sadd.s32 1, %s20
    $region7: #{tpu_custom_call.1} parent=1 // loop_footer_branch
      %19 = sbr.rel target = $region3
    $region8: #{tpu_custom_call.1} parent=1 // loop_exit
      _
    %1063 = vsyncpa [#allocation3], 1
    %s1064 = scalar_lea.sflag [#allocation3], 1
    %1065 = vsyncpa %s1064, 1
    %1066 = vsyncpa [#allocation6], 1
    %1067 = vsyncpa [#allocation4], 1
    %s1068 = scalar_lea.sflag [#allocation4], 1
    %1069 = vsyncpa %s1068, 1

</llo_original>
